<compile_context>
chip_gen: v7x
topology: tpu7x:2x2x1
jax: 0.10.0
libtpu: 0.0.40
codegen_flags: <defaults>
</compile_context>

<pallas_src>
import functools

import numpy as np
import jax
import jax.numpy as jnp
from jax.experimental import pallas as pl
from jax.experimental.pallas import tpu as pltpu


_TB_CAP = 1024                           # max batch-tile rows
_BN_CAP = 1024                           # max lane-tile columns (multiple of 128)
_INPUT_VMEM_BUDGET = 32 * 1024 * 1024    # 2 inputs x 2 pipeline buffers
_VMEM_LIMIT = 48 * 1024 * 1024           # > 32 MiB default, < v7x 64 MiB physical


def _cdiv(a, b):
    return -(-a // b)


def _round_up(a, m):
    return _cdiv(a, m) * m


def _bce_kernel(x_ref, y_ref, out_ref, *, batch_size, tb, nb_per, nb_real, padded):
    """One (tb, bn) tile of stable BCE; accumulate 8-row groups into out block."""
    c = pl.program_id(0)          # batch-chunk (dual-TC) axis
    i = pl.program_id(2)          # batch block within this chunk (reduction axis)

    @pl.when(i == 0)
    def _init():
        out_ref[...] = jnp.zeros_like(out_ref)

    x = x_ref[...].astype(jnp.float32)        # (tb, bn) logits
    y = y_ref[...].astype(jnp.float32)        # (tb, bn) targets in [0, 1]

    # Numerically-stable BCEWithLogits (same formula PyTorch uses):
    #   loss = max(x, 0) - x*y + log(1 + exp(-|x|))
    loss = jnp.maximum(x, 0.0) - x * y + jnp.log1p(jnp.exp(-jnp.abs(x)))

    def _accumulate(l):
        # Pure full-vreg VALU adds of aligned 8-row groups; the final
        # cross-sublane 8 -> 1 reduce is done outside the kernel.
        part = l[0:8, :]
        for g in range(1, tb // 8):
            part = part + l[8 * g:8 * (g + 1), :]
        out_ref[...] += part

    if padded:                        # static: only when B % tb != 0
        gb = c * nb_per + i           # global batch-block index

        @pl.when(gb >= nb_real - 1)   # only the last real block has padded rows
        def _masked():
            row = gb * tb + jax.lax.broadcasted_iota(jnp.int32, loss.shape, 0)
            _accumulate(jnp.where(row < batch_size, loss, 0.0))

        @pl.when(gb < nb_real - 1)
        def _fast():
            _accumulate(loss)
    else:
        _accumulate(loss)

    @pl.when(i == nb_per - 1)
    def _finalize():
        out_ref[...] = out_ref[...] * jnp.float32(1.0 / batch_size)


def _pick_tiles(B, N, itemsize_x, itemsize_y):
    # Sublane multiple: 8 for 4-byte dtypes, 16 for 2-byte, 32 for 1-byte.
    sub = max(8, 32 // min(itemsize_x, itemsize_y))

    # Lane tile: multiple of 128 (full N only when N < 128).
    if N < 128:
        bn = N
    else:
        bn = min(_BN_CAP, _round_up(N, 128))
    nb_n = _cdiv(N, bn)

    # Batch tile cap from the double-buffered input VMEM budget.
    bytes_per_row = 2 * (itemsize_x + itemsize_y) * bn
    tb_cap = min(_TB_CAP, (_INPUT_VMEM_BUDGET // bytes_per_row) // sub * sub)
    tb_cap = max(sub, tb_cap)

    # Dual-TC chunking of the batch range when the N axis has no parallelism.
    C = 2 if (nb_n == 1 and B >= 2 * sub) else 1
    nb_b = C * _cdiv(_cdiv(B, tb_cap), C)     # batch blocks, even per chunk
    tb = _round_up(_cdiv(B, nb_b), sub)       # even split of B (<= tb_cap)
    nb_per = nb_b // C                        # batch blocks per chunk
    nb_real = _cdiv(B, tb)                    # blocks that touch rows < B
    return tb, bn, C, nb_n, nb_per, nb_real


def bce_with_logits_loss_1d(input_, target, targets):
    """Pallas equivalent of BCEWithLogitsLoss1D.forward.

    Args:
      input_:  (B, N) logits (any float dtype; bf16 passes through HBM as-is)
      target:  (B, N) targets
      targets: list of N target names
    Returns:
      (scalar mean loss (jnp), dict name -> per-target loss float)
    """
    B, N = input_.shape
    assert target.shape == (B, N)
    assert len(targets) == N

    it_x = jnp.dtype(input_.dtype).itemsize
    it_y = jnp.dtype(target.dtype).itemsize
    tb, bn, C, nb_n, nb_per, nb_real = _pick_tiles(B, N, it_x, it_y)
    padded = (C * nb_per * tb) != B

    def in_map(c, j, i):
        gb = c * nb_per + i
        # Clamp for robustness (clamped duplicates are fully masked in-kernel).
        return (jnp.minimum(gb, nb_real - 1), j)

    kernel = functools.partial(
        _bce_kernel, batch_size=B, tb=tb, nb_per=nb_per, nb_real=nb_real,
        padded=padded)

    cost = pl.CostEstimate(
        flops=5 * B * N,
        transcendentals=2 * B * N,
        bytes_accessed=B * N * (it_x + it_y) + C * 8 * N * 4,
    )

    partials = pl.pallas_call(
        kernel,
        out_shape=jax.ShapeDtypeStruct((C, 8, N), jnp.float32),
        grid=(C, nb_n, nb_per),
        in_specs=[
            pl.BlockSpec((tb, bn), in_map),
            pl.BlockSpec((tb, bn), in_map),
        ],
        out_specs=pl.BlockSpec((None, 8, bn), lambda c, j, i: (c, 0, j)),
        compiler_params=pltpu.CompilerParams(
            dimension_semantics=("parallel", "parallel", "arbitrary"),
            vmem_limit_bytes=_VMEM_LIMIT,
        ),
        cost_estimate=cost,
    )(input_, target)

    per_loss = partials.sum(axis=(0, 1))     # (N,): mean over batch per target
    scalar = jnp.mean(per_loss)              # scalar mean over targets

    per_np = np.asarray(jax.device_get(per_loss))   # one bulk D2H transfer
    loss_dict = {k: float(per_np[idx]) for idx, k in enumerate(targets)}
    return scalar, loss_dict


def _reference(logits, labels):
    x = logits.astype(jnp.float32)
    y = labels.astype(jnp.float32)
    elem = jnp.maximum(x, 0.0) - x * y + jnp.log1p(jnp.exp(-jnp.abs(x)))
    per = elem.mean(0)
    return per, per.mean()


if __name__ == "__main__":
    key = jax.random.PRNGKey(0)
    ks = jax.random.split(key, 8)

    def _check(logits, labels, names, tol):
        loss_mean, loss_dict = bce_with_logits_loss_1d(logits, labels, names)
        jax.block_until_ready(loss_mean)
        ref_per, ref_mean = _reference(logits, labels)
        ref_np = np.asarray(ref_per)
        assert jnp.allclose(loss_mean, ref_mean, atol=tol, rtol=tol), (
            float(loss_mean), float(ref_mean))
        assert all(abs(loss_dict[k] - float(ref_np[i])) < tol
                   for i, k in enumerate(names))

    # 1) Small module-spec shape (B, N) = (8, 16), f32: single tile, no padding.
    B, N = 8, 16
    names = [f"target_{i}" for i in range(N)]
    logits = jax.random.normal(ks[0], (B, N), dtype=jnp.float32)
    labels = (jax.random.uniform(ks[1], (B, N)) > 0.5).astype(jnp.float32)
    _check(logits, labels, names, 1e-5)

    # 2) bf16 inputs, dual-chunk batch split (C=2), padded last batch block.
    B2, N2 = 1030, 128
    names2 = [f"t{i}" for i in range(N2)]
    logits2 = jax.random.normal(ks[2], (B2, N2), dtype=jnp.bfloat16)
    labels2 = (jax.random.uniform(ks[3], (B2, N2)) > 0.5).astype(jnp.bfloat16)
    _check(logits2, labels2, names2, 2e-3)

    # 3) f32, N not a multiple of 128 (partial lane block), C=2, padded batch.
    B3, N3 = 24, 200
    names3 = [f"n{i}" for i in range(N3)]
    logits3 = jax.random.normal(ks[4], (B3, N3), dtype=jnp.float32)
    labels3 = (jax.random.uniform(ks[5], (B3, N3)) > 0.5).astype(jnp.float32)
    _check(logits3, labels3, names3, 1e-5)

    # 4) f32, multiple N blocks + multiple batch blocks + padded last block.
    B4, N4 = 2100, 1152
    names4 = [f"m{i}" for i in range(N4)]
    logits4 = jax.random.normal(ks[6], (B4, N4), dtype=jnp.float32)
    labels4 = (jax.random.uniform(ks[7], (B4, N4)) > 0.5).astype(jnp.float32)
    _check(logits4, labels4, names4, 1e-4)

    print("KERNEL_OK")
</pallas_src>

<mosaic_0001>
module attributes {stable_mosaic.version = 11 : i64} {
  func.func @_bce_kernel(%arg0: i32, %arg1: i32, %arg2: i32, %arg3: memref<8x16xf32, #tpu.memory_space<vmem>>, %arg4: memref<8x16xf32, #tpu.memory_space<vmem>>, %arg5: memref<1x8x16xf32, #tpu.memory_space<vmem>>) attributes {dimension_semantics = [#tpu.dimension_semantics<parallel>, #tpu.dimension_semantics<parallel>, #tpu.dimension_semantics<arbitrary>], iteration_bounds = array<i64: 1, 1, 1>, scalar_prefetch = 0 : i64, scratch_operands = 0 : i64, tpu.core_type = #tpu.core_type<tc>, window_params = [{transform_indices = @transform_0, window_bounds = array<i64: 8, 16>}, {transform_indices = @transform_1, window_bounds = array<i64: 8, 16>}, {transform_indices = @transform_2, window_bounds = array<i64: 1, 8, 16>}]} {
    %c0_i32 = arith.constant 0 : i32
    %0 = arith.cmpi eq, %arg2, %c0_i32 : i32
    %1 = arith.extui %0 : i1 to i32
    %c0_i32_0 = arith.constant 0 : i32
    %2 = arith.cmpi ne, %1, %c0_i32_0 : i32
    scf.if %2 {
      %cst_13 = arith.constant 0.000000e+00 : f32
      %24 = vector.broadcast %cst_13 : f32 to vector<8x16xf32>
      %c0_14 = arith.constant 0 : index
      %c0_15 = arith.constant 0 : index
      %c0_16 = arith.constant 0 : index
      %25 = vector.load %arg5[%c0_14, %c0_15, %c0_16] : memref<1x8x16xf32, #tpu.memory_space<vmem>>, vector<1x8x16xf32>
      %26 = vector.shape_cast %25 : vector<1x8x16xf32> to vector<8x16xf32>
      %27 = vector.shape_cast %24 : vector<8x16xf32> to vector<1x8x16xf32>
      tpu.vector_store %arg5[%c0_14, %c0_15, %c0_16], %27 {strides = array<i32>} : memref<1x8x16xf32, #tpu.memory_space<vmem>>, vector<1x8x16xf32>,
    } else {
    }
    %c0 = arith.constant 0 : index
    %c0_1 = arith.constant 0 : index
    %3 = vector.load %arg3[%c0, %c0_1] : memref<8x16xf32, #tpu.memory_space<vmem>>, vector<8x16xf32>
    %c0_2 = arith.constant 0 : index
    %c0_3 = arith.constant 0 : index
    %4 = vector.load %arg4[%c0_2, %c0_3] : memref<8x16xf32, #tpu.memory_space<vmem>>, vector<8x16xf32>
    %cst = arith.constant 0.000000e+00 : f32
    %5 = vector.broadcast %cst : f32 to vector<8x16xf32>
    %6 = arith.maximumf %3, %5 : vector<8x16xf32>
    %7 = arith.mulf %3, %4 : vector<8x16xf32>
    %8 = arith.subf %6, %7 : vector<8x16xf32>
    %9 = math.absf %3 : vector<8x16xf32>
    %cst_4 = arith.constant 0.000000e+00 : f32
    %10 = vector.broadcast %cst_4 : f32 to vector<8x16xf32>
    %11 = arith.subf %10, %9 : vector<8x16xf32>
    %12 = math.exp %11 : vector<8x16xf32>
    %13 = math.log1p %12 : vector<8x16xf32>
    %14 = arith.addf %8, %13 : vector<8x16xf32>
    %c0_5 = arith.constant 0 : index
    %c0_6 = arith.constant 0 : index
    %c0_7 = arith.constant 0 : index
    %15 = vector.load %arg5[%c0_5, %c0_6, %c0_7] : memref<1x8x16xf32, #tpu.memory_space<vmem>>, vector<1x8x16xf32>
    %16 = vector.shape_cast %15 : vector<1x8x16xf32> to vector<8x16xf32>
    %17 = arith.addf %16, %14 : vector<8x16xf32>
    %c0_8 = arith.constant 0 : index
    %c0_9 = arith.constant 0 : index
    %c0_10 = arith.constant 0 : index
    %18 = vector.load %arg5[%c0_8, %c0_9, %c0_10] : memref<1x8x16xf32, #tpu.memory_space<vmem>>, vector<1x8x16xf32>
    %19 = vector.shape_cast %18 : vector<1x8x16xf32> to vector<8x16xf32>
    %20 = vector.shape_cast %17 : vector<8x16xf32> to vector<1x8x16xf32>
    tpu.vector_store %arg5[%c0_8, %c0_9, %c0_10], %20 {strides = array<i32>} : memref<1x8x16xf32, #tpu.memory_space<vmem>>, vector<1x8x16xf32>,
    %c0_i32_11 = arith.constant 0 : i32
    %21 = arith.cmpi eq, %arg2, %c0_i32_11 : i32
    %22 = arith.extui %21 : i1 to i32
    %c0_i32_12 = arith.constant 0 : i32
    %23 = arith.cmpi ne, %22, %c0_i32_12 : i32
    scf.if %23 {
      %c0_13 = arith.constant 0 : index
      %c0_14 = arith.constant 0 : index
      %c0_15 = arith.constant 0 : index
      %24 = vector.load %arg5[%c0_13, %c0_14, %c0_15] : memref<1x8x16xf32, #tpu.memory_space<vmem>>, vector<1x8x16xf32>
      %25 = vector.shape_cast %24 : vector<1x8x16xf32> to vector<8x16xf32>
      %cst_16 = arith.constant 1.250000e-01 : f32
      %26 = vector.broadcast %cst_16 : f32 to vector<8x16xf32>
      %27 = arith.mulf %25, %26 : vector<8x16xf32>
      %c0_17 = arith.constant 0 : index
      %c0_18 = arith.constant 0 : index
      %c0_19 = arith.constant 0 : index
      %28 = vector.load %arg5[%c0_17, %c0_18, %c0_19] : memref<1x8x16xf32, #tpu.memory_space<vmem>>, vector<1x8x16xf32>
      %29 = vector.shape_cast %28 : vector<1x8x16xf32> to vector<8x16xf32>
      %30 = vector.shape_cast %27 : vector<8x16xf32> to vector<1x8x16xf32>
      tpu.vector_store %arg5[%c0_17, %c0_18, %c0_19], %30 {strides = array<i32>} : memref<1x8x16xf32, #tpu.memory_space<vmem>>, vector<1x8x16xf32>,
    } else {
    }
    return
  }
  func.func @transform_0(%arg0: i32, %arg1: i32, %arg2: i32) -> (i32, i32) {
    %c1_i32 = arith.constant 1 : i32
    %0 = arith.muli %arg0, %c1_i32 : i32
    %1 = arith.addi %0, %arg2 : i32
    %c0_i32 = arith.constant 0 : i32
    %2 = arith.minsi %1, %c0_i32 : i32
    %c0_i32_0 = arith.constant 0 : i32
    return %2, %arg1 : i32, i32
  }
  func.func @transform_1(%arg0: i32, %arg1: i32, %arg2: i32) -> (i32, i32) {
    %c1_i32 = arith.constant 1 : i32
    %0 = arith.muli %arg0, %c1_i32 : i32
    %1 = arith.addi %0, %arg2 : i32
    %c0_i32 = arith.constant 0 : i32
    %2 = arith.minsi %1, %c0_i32 : i32
    %c0_i32_0 = arith.constant 0 : i32
    return %2, %arg1 : i32, i32
  }
  func.func @transform_2(%arg0: i32, %arg1: i32, %arg2: i32) -> (i32, i32, i32) {
    %c0_i32 = arith.constant 0 : i32
    %c0_i32_0 = arith.constant 0 : i32
    return %arg0, %c0_i32, %arg1 : i32, i32, i32
  }
}

</mosaic_0001>

<llo_original>
// kernel: tpu_custom_call.1
$region0: #{tpu_custom_call.1}
  #allocation0 [shape = 'u32[]', space=smem, size = 0x4, offset = 0x4, fixed_abs, tag = 'smem constant byte address 0x4 - core index']
  #allocation1 [shape = 'u32[144,128]{1,0:T(1,128)}', space=vmem, size = 0x12000, scoped, tag = 'internal scratch']
  %s0 = inlined_call_operand.hbm [shape: f32[8,16], index: 0, kind: input, shape index: {}]
  %s1 = inlined_call_operand.hbm [shape: f32[8,16], index: 1, kind: input, shape index: {}]
  %s2 = inlined_call_operand.hbm [shape: f32[1,8,16], index: 2, kind: output, shape index: {}]
  %s3 = sld [smem:[#allocation0]]
  $region34: #{tpu_custom_call.1} parent=0
    _
  %s5 = ssub.s32 1, %s3
  %s6 = scalar_select 0, %s5, %s3
  $region1: #{tpu_custom_call.1} parent=0
    #allocation2 [shape = 'u8[4096]{0}', space=vmem, size = 0x1000, scoped, tag = 'input window, operand 0, single buffered']
    #allocation3 [shape = 's32[1]{0}', space=sflag, size = 0x4, scoped, tag = 'scoped memory for tpu_custom_call.1']
    #allocation4 [shape = 's32[1]{0}', space=sflag, size = 0x4, scoped, tag = 'scoped memory for tpu_custom_call.1']
    #allocation5 [shape = 'u8[4096]{0}', space=vmem, size = 0x1000, scoped, tag = 'input window, operand 1, single buffered']
    #allocation6 [shape = 's32[1]{0}', space=sflag, size = 0x4, scoped, tag = 'scoped memory for tpu_custom_call.1']
    #allocation7 [shape = 'u8[4096]{0}', space=vmem, size = 0x1000, scoped, tag = 'output window, operand 0, single buffered']
    %7 = vsyncpa [#allocation3], 0
    %8 = vsyncpa [#allocation6], 0
    %9 = vsyncpa [#allocation4], 0
    // Predicated region
    $region2: #{tpu_custom_call.1} parent=1 // pred_check
      _
    $region3: #{tpu_custom_call.1} parent=1 // pred_check_branch
      %11 = sbr.rel (0) target = $region5
    $region4: #{tpu_custom_call.1} parent=1 // pred_region
      %s12 = sadd.s32 0, 0
      %p13 = scmp.lt.s32.totalorder %s12, 0
      %s14 = scalar_select %p13, %s12, 0
      %s16 = ssub.s32 128, 128
      %17 = vsyncadd [#allocation3], %s16
      %s18 = smul.addr %s14, 128
      %s19 = scalar_lea.hbm %s0, %s18
      %s21 = sshll.u32 [#allocation2], 4
      %s22 = int_to_ptr.vmem [resolvable:$true] %s21
      %24 = dma.hbm_to_vmem [thread:$0]  %s19, 128, %s22, [#allocation3]
    $region5: #{tpu_custom_call.1} parent=1 // pred_fallthru
      _
    // Predicated region
    $region6: #{tpu_custom_call.1} parent=1 // pred_check
      _
    $region7: #{tpu_custom_call.1} parent=1 // pred_check_branch
      %26 = sbr.rel (0) target = $region9
    $region8: #{tpu_custom_call.1} parent=1 // pred_region
      %s27 = sadd.s32 0, 0
      %p28 = scmp.lt.s32.totalorder %s27, 0
      %s29 = scalar_select %p28, %s27, 0
      %s31 = ssub.s32 128, 128
      %32 = vsyncadd [#allocation6], %s31
      %s33 = smul.addr %s29, 128
      %s34 = scalar_lea.hbm %s1, %s33
      %s36 = sshll.u32 [#allocation5], 4
      %s37 = int_to_ptr.vmem [resolvable:$true] %s36
      %39 = dma.hbm_to_vmem [thread:$0]  %s34, 128, %s37, [#allocation6]
    $region9: #{tpu_custom_call.1} parent=1 // pred_fallthru
      _
    // Predicated region
    $region10: #{tpu_custom_call.1} parent=1 // pred_check
      _
    $region11: #{tpu_custom_call.1} parent=1 // pred_check_branch
      %41 = sbr.rel (0) target = $region13
    $region12: #{tpu_custom_call.1} parent=1 // pred_region
      %42 = dma.done [#allocation3], 128
    $region13: #{tpu_custom_call.1} parent=1 // pred_fallthru
      _
    // Predicated region
    $region14: #{tpu_custom_call.1} parent=1 // pred_check
      _
    $region15: #{tpu_custom_call.1} parent=1 // pred_check_branch
      %44 = sbr.rel (0) target = $region17
    $region16: #{tpu_custom_call.1} parent=1 // pred_region
      %45 = dma.done [#allocation6], 128
    $region17: #{tpu_custom_call.1} parent=1 // pred_fallthru
      _
    %s46 = sadd.s32 0, 0
    %p47 = scmp.lt.s32.totalorder %s46, 0
    %s48 = scalar_select %p47, %s46, 0
    %s49 = sadd.s32 0, 0
    %p50 = scmp.lt.s32.totalorder %s49, 0
    %s51 = scalar_select %p50, %s49, 0
    %p52 = scmp.eq.s32.totalorder 0, 0
    // Predicated region
    $region18: #{tpu_custom_call.1} parent=1 // pred_check
      %p53 = pneg %p52
    $region19: #{tpu_custom_call.1} parent=1 // pred_check_branch
      %55 = sbr.rel (%p53) target = $region21
    $region20: #{tpu_custom_call.1} parent=1 // pred_region
      %vm56 = vcmask 130048
      %57 = vst.msk [vmem:[#allocation7] sm:$0xff] %vm56, 0.0
    $region21: #{tpu_custom_call.1} parent=1 // pred_fallthru
      _
    %v58 = vld [vmem:[#allocation2] sm:$0xff]
    %v59 = vld [vmem:[#allocation5] sm:$0xff]
    %v60 = vmax.f32 %v58, 0.0
    %v61 = vmul.f32 %v58, %v59
    %v62 = vsub.f32 %v60, %v61
    %v63 = vand.u32 2147483647, %v58
    %v64 = vsub.f32 0.0, %v63
    %v65 = vmul.f32 %v64, 1.442695
    %v66 = vpow.pop %v65
    %v67 = vadd.f32 %v66, 1.0
    %v68 = vlog2.pop %v67
    %v69 = vmul.f32 %v68, 0.6931472
    %v70 = vmul.f32 -0.5, %v66
    %v71 = vadd.f32 %v70, 1.0
    %v72 = vmul.f32 %v71, %v66
    %v73 = vand.u32 2147483647, %v66
    %vm74 = vcmp.lt.f32.partialorder %v73, 0.0004427343
    %v75 = vsel %vm74, %v72, %v69
    %v76 = vadd.f32 %v62, %v75
    %v77 = vld [vmem:[#allocation7] sm:$0xff]
    %v78 = vadd.f32 %v77, %v76
    %vm79 = vcmask 130048
    %80 = vst.msk [vmem:[#allocation7] sm:$0xff] %vm79, %v78
    // Predicated region
    $region22: #{tpu_custom_call.1} parent=1 // pred_check
      %p81 = pneg %p52
    $region23: #{tpu_custom_call.1} parent=1 // pred_check_branch
      %83 = sbr.rel (%p81) target = $region25
    $region24: #{tpu_custom_call.1} parent=1 // pred_region
      %v84 = vld [vmem:[#allocation7] sm:$0xff]
      %v85 = vmul.f32 %v84, 0.125
      %86 = vst.msk [vmem:[#allocation7] sm:$0xff] %vm79, %v85
    $region25: #{tpu_custom_call.1} parent=1 // pred_fallthru
      _
    // Predicated region
    $region26: #{tpu_custom_call.1} parent=1 // pred_check
      _
    $region27: #{tpu_custom_call.1} parent=1 // pred_check_branch
      %88 = sbr.rel (0) target = $region29
    $region28: #{tpu_custom_call.1} parent=1 // pred_region
      %s90 = ssub.s32 128, 128
      %91 = vsyncadd [#allocation4], %s90
      %s93 = sshll.u32 [#allocation7], 4
      %s94 = int_to_ptr.vmem [resolvable:$true] %s93
      %96 = dma.vmem_to_hbm [thread:$0]  %s94, 128, %s2, [#allocation4]
    $region29: #{tpu_custom_call.1} parent=1 // pred_fallthru
      _
    // Predicated region
    $region30: #{tpu_custom_call.1} parent=1 // pred_check
      _
    $region31: #{tpu_custom_call.1} parent=1 // pred_check_branch
      %98 = sbr.rel (0) target = $region33
    $region32: #{tpu_custom_call.1} parent=1 // pred_region
      %99 = dma.done [#allocation4], 128
    $region33: #{tpu_custom_call.1} parent=1 // pred_fallthru
      _
    %100 = vsyncpa [#allocation3], 1
    %101 = vsyncpa [#allocation6], 1
    %102 = vsyncpa [#allocation4], 1

</llo_original>
